<compile_context>
chip_gen: v7x
topology: tpu7x:2x2x1
jax: 0.10.0
libtpu: 0.0.40
codegen_flags: <defaults>
</compile_context>

<pallas_src>
import functools
import math

import jax
import jax.numpy as jnp
from jax.experimental import pallas as pl
from jax.experimental.pallas import tpu as pltpu

# Model hyper-parameters implied by the module (s.model / s.dataset), kept small.
NUM_EMBDS = 32          # C
NUM_HEADS = 4           # H
HEAD_DIM = NUM_EMBDS // NUM_HEADS   # D = 8
CONTEXT = 8             # T
BATCH = 2               # B


# --------------------------------------------------------------------------
# One-time parameter preprocessing (offline; weights are static).
# --------------------------------------------------------------------------
def prepare_attention_params(wqkv, bqkv, wproj, bproj, *, num_heads):
    """Permute QKV output columns to head-major [q_h|k_h|v_h]*H and fold the
    1/sqrt(D) attention scale into the Q columns (weight AND bias)."""
    C = wqkv.shape[0]
    H = num_heads
    D = C // H
    scale = 1.0 / math.sqrt(D)

    wq, wk, wv = wqkv[:, :C] * scale, wqkv[:, C:2 * C], wqkv[:, 2 * C:]
    bq, bk, bv = bqkv[:, :C] * scale, bqkv[:, C:2 * C], bqkv[:, 2 * C:]

    w_blocks, b_blocks = [], []
    for h in range(H):
        sl = slice(h * D, (h + 1) * D)
        w_blocks += [wq[:, sl], wk[:, sl], wv[:, sl]]
        b_blocks += [bq[:, sl], bk[:, sl], bv[:, sl]]
    wqkv_hm = jnp.concatenate(w_blocks, axis=1)    # (C, 3C), head-major columns
    bqkv_hm = jnp.concatenate(b_blocks, axis=1)    # (1, 3C), head-major columns
    return wqkv_hm, bqkv_hm, wproj, bproj


def build_attention_mask(B, T, H):
    """Additive mask over the head-packed (H*B*T, H*B*T) score matrix:
    0 where (same head) & (same batch) & (key_t <= query_t), else -1e30.
    Finite (pad/NaN-safe); every row keeps at least its diagonal."""
    N = B * T
    HN = H * N
    r = jnp.arange(HN)
    head = r // N
    rem = r % N
    batch = rem // T
    t = rem % T
    allowed = ((head[:, None] == head[None, :])
               & (batch[:, None] == batch[None, :])
               & (t[None, :] <= t[:, None]))
    return jnp.where(allowed, 0.0, -1e30).astype(jnp.float32)


# --------------------------------------------------------------------------
# Kernel: whole forward pass (all batches, all heads) in one invocation.
# --------------------------------------------------------------------------
def _attn_kernel(x_ref, wqkv_ref, bqkv_ref, wproj_ref, bproj_ref, mask_ref,
                 o_ref, *, B, T, C, H, D):
    N = B * T
    HN = H * N
    Dh = 3 * D

    x = x_ref[...]                                                       # (N, C)

    # Fused QKV projection: one (N, C) @ (C, 3C) MXU pass.  Columns are
    # already head-major and the q columns carry the 1/sqrt(D) scale.
    qkv = jnp.dot(x, wqkv_ref[...],
                  preferred_element_type=jnp.float32) + bqkv_ref[...]    # (N, H*3D)

    # Single head-packing relayout: (N, H*3D) -> (H*N, 3D).  Because the
    # weight columns were permuted offline, one static-lane-slice repack
    # covers q, k and v simultaneously.
    packed = jnp.concatenate(
        [qkv[:, h * Dh:(h + 1) * Dh] for h in range(H)], axis=0)         # (HN, 3D)
    q = packed[:, 0 * D:1 * D]                                           # (HN, D)
    k = packed[:, 1 * D:2 * D]                                           # (HN, D)
    v = packed[:, 2 * D:3 * D]                                           # (HN, D)

    # ONE score matmul for all heads and batches; cross-head / cross-batch /
    # non-causal entries are neutralized by the precomputed additive mask.
    s = jnp.einsum('nd,md->nm', q, k,
                   preferred_element_type=jnp.float32) + mask_ref[...]   # (HN, HN)

    m = jnp.max(s, axis=-1, keepdims=True)
    p = jnp.exp(s - m)
    denom = jnp.sum(p, axis=-1, keepdims=True)
    p = p / denom                      # exact divide: kernel is latency-bound

    # ONE PV matmul for all heads and batches.
    y_packed = jnp.dot(p, v, preferred_element_type=jnp.float32)         # (HN, D)

    # Unpack heads back onto the lane axis: (H*N, D) -> (N, C).
    y = jnp.concatenate(
        [y_packed[h * N:(h + 1) * N, :] for h in range(H)], axis=1)      # (N, C)

    # Output projection; store (N, C) directly (no lane repack).
    out = jnp.dot(y, wproj_ref[...],
                  preferred_element_type=jnp.float32) + bproj_ref[...]   # (N, C)
    o_ref[...] = out.astype(o_ref.dtype)


# --------------------------------------------------------------------------
# Wrapper.
# --------------------------------------------------------------------------
def causal_self_attention(x, wqkv_hm, bqkv_hm, wproj, bproj, mask, *,
                          num_heads=NUM_HEADS):
    """x: (B, T, C); weights already preprocessed by prepare_attention_params;
    mask from build_attention_mask."""
    B, T, C = x.shape
    H = num_heads
    D = C // H
    N = B * T
    HN = H * N

    kernel = functools.partial(_attn_kernel, B=B, T=T, C=C, H=H, D=D)

    out = pl.pallas_call(
        kernel,
        out_shape=jax.ShapeDtypeStruct((N, C), x.dtype),
        grid=(1,),  # whole problem (~20 KB incl. mask) lives in VMEM
        in_specs=[
            pl.BlockSpec((N, C), lambda i: (0, 0)),          # x flattened (B*T, C)
            pl.BlockSpec((C, 3 * C), lambda i: (0, 0)),      # W_qkv (head-major)
            pl.BlockSpec((1, 3 * C), lambda i: (0, 0)),      # b_qkv (head-major)
            pl.BlockSpec((C, C), lambda i: (0, 0)),          # W_proj
            pl.BlockSpec((1, C), lambda i: (0, 0)),          # b_proj
            pl.BlockSpec((HN, HN), lambda i: (0, 0)),        # additive mask
        ],
        out_specs=pl.BlockSpec((N, C), lambda i: (0, 0)),
        compiler_params=pltpu.CompilerParams(
            dimension_semantics=("arbitrary",)),
    )(x.reshape(N, C), wqkv_hm, bqkv_hm, wproj, bproj, mask)

    return out.reshape(B, T, C)


# --------------------------------------------------------------------------
# Pure-JAX reference (uses the ORIGINAL, unprepared weights), matching
# torch F.scaled_dot_product_attention(is_causal=True).
# --------------------------------------------------------------------------
def reference(x, wqkv, bqkv, wproj, bproj):
    B, T, C = x.shape
    H, D = NUM_HEADS, C // NUM_HEADS
    qkv = x @ wqkv + bqkv[0]
    q, k, v = jnp.split(qkv, 3, axis=-1)
    q = q.reshape(B, T, H, D).transpose(0, 2, 1, 3)
    k = k.reshape(B, T, H, D).transpose(0, 2, 1, 3)
    v = v.reshape(B, T, H, D).transpose(0, 2, 1, 3)
    s = jnp.einsum("bhqd,bhkd->bhqk", q, k) / math.sqrt(D)
    mask = jnp.tril(jnp.ones((T, T), dtype=bool))
    s = jnp.where(mask, s, -jnp.inf)
    p = jax.nn.softmax(s, axis=-1)
    y = jnp.einsum("bhqk,bhkd->bhqd", p, v)
    y = y.transpose(0, 2, 1, 3).reshape(B, T, C)
    return y @ wproj + bproj[0]


if __name__ == "__main__":
    key = jax.random.PRNGKey(0)
    kx, k1, k2, k3, k4 = jax.random.split(key, 5)

    C = NUM_EMBDS
    x = jax.random.normal(kx, (BATCH, CONTEXT, C), dtype=jnp.float32)

    # Deterministic parameter init (shapes from nn.Linear(C, 3C) / nn.Linear(C, C)).
    wqkv = 0.02 * jax.random.normal(k1, (C, 3 * C), dtype=jnp.float32)
    bqkv = 0.02 * jax.random.normal(k2, (1, 3 * C), dtype=jnp.float32)
    wproj = 0.02 * jax.random.normal(k3, (C, C), dtype=jnp.float32)
    bproj = 0.02 * jax.random.normal(k4, (1, C), dtype=jnp.float32)

    # One-time preprocessing: head-major column permutation + scale fold + mask.
    prepared = prepare_attention_params(wqkv, bqkv, wproj, bproj,
                                        num_heads=NUM_HEADS)
    mask = build_attention_mask(BATCH, CONTEXT, NUM_HEADS)

    out = causal_self_attention(x, *prepared, mask, num_heads=NUM_HEADS)
    out = jax.block_until_ready(out)

    ref = reference(x, wqkv, bqkv, wproj, bproj)
    assert out.shape == (BATCH, CONTEXT, C)
    assert jnp.allclose(out, ref, atol=1e-4, rtol=1e-3), "mismatch vs reference"

    print("KERNEL_OK")
</pallas_src>

<mosaic_0001>
module attributes {stable_mosaic.version = 11 : i64} {
  func.func @_attn_kernel(%arg0: i32, %arg1: memref<16x32xf32, #tpu.memory_space<vmem>>, %arg2: memref<32x96xf32, #tpu.memory_space<vmem>>, %arg3: memref<1x96xf32, #tpu.memory_space<vmem>>, %arg4: memref<32x32xf32, #tpu.memory_space<vmem>>, %arg5: memref<1x32xf32, #tpu.memory_space<vmem>>, %arg6: memref<64x64xf32, #tpu.memory_space<vmem>>, %arg7: memref<16x32xf32, #tpu.memory_space<vmem>>) attributes {dimension_semantics = [#tpu.dimension_semantics<arbitrary>], iteration_bounds = array<i64: 1>, scalar_prefetch = 0 : i64, scratch_operands = 0 : i64, tpu.core_type = #tpu.core_type<tc>, window_params = [{pipeline_mode = #tpu.pipeline_mode<synchronous>, transform_indices = @transform_0, window_bounds = array<i64: 16, 32>}, {pipeline_mode = #tpu.pipeline_mode<synchronous>, transform_indices = @transform_1, window_bounds = array<i64: 32, 96>}, {pipeline_mode = #tpu.pipeline_mode<synchronous>, transform_indices = @transform_2, window_bounds = array<i64: 1, 96>}, {pipeline_mode = #tpu.pipeline_mode<synchronous>, transform_indices = @transform_3, window_bounds = array<i64: 32, 32>}, {pipeline_mode = #tpu.pipeline_mode<synchronous>, transform_indices = @transform_4, window_bounds = array<i64: 1, 32>}, {pipeline_mode = #tpu.pipeline_mode<synchronous>, transform_indices = @transform_5, window_bounds = array<i64: 64, 64>}, {pipeline_mode = #tpu.pipeline_mode<synchronous>, transform_indices = @transform_6, window_bounds = array<i64: 16, 32>}]} {
    %c0 = arith.constant 0 : index
    %c0_0 = arith.constant 0 : index
    %0 = vector.load %arg1[%c0, %c0_0] : memref<16x32xf32, #tpu.memory_space<vmem>>, vector<16x32xf32>
    %c0_1 = arith.constant 0 : index
    %c0_2 = arith.constant 0 : index
    %1 = vector.load %arg2[%c0_1, %c0_2] : memref<32x96xf32, #tpu.memory_space<vmem>>, vector<32x96xf32>
    %cst = arith.constant dense<0.000000e+00> : vector<16x96xf32>
    %2 = tpu.matmul %0, %1, %cst {dimension_numbers = #tpu.dot_dimension_numbers<[1], [0], [0], [1], [0, 0, 1, 1], [], []>} : vector<16x32xf32>, vector<32x96xf32>, vector<16x96xf32> -> vector<16x96xf32>
    %c0_3 = arith.constant 0 : index
    %c0_4 = arith.constant 0 : index
    %3 = vector.load %arg3[%c0_3, %c0_4] : memref<1x96xf32, #tpu.memory_space<vmem>>, vector<1x96xf32>
    %4 = vector.broadcast %3 : vector<1x96xf32> to vector<16x96xf32>
    %5 = arith.addf %2, %4 : vector<16x96xf32>
    %6 = vector.extract_strided_slice %5 {offsets = [0, 0], sizes = [16, 24], strides = [1, 1]} : vector<16x96xf32> to vector<16x24xf32>
    %7 = vector.extract_strided_slice %5 {offsets = [0, 24], sizes = [16, 24], strides = [1, 1]} : vector<16x96xf32> to vector<16x24xf32>
    %8 = vector.extract_strided_slice %5 {offsets = [0, 48], sizes = [16, 24], strides = [1, 1]} : vector<16x96xf32> to vector<16x24xf32>
    %9 = vector.extract_strided_slice %5 {offsets = [0, 72], sizes = [16, 24], strides = [1, 1]} : vector<16x96xf32> to vector<16x24xf32>
    %10 = tpu.concatenate %6, %7, %8, %9 in 0 : vector<16x24xf32>, vector<16x24xf32>, vector<16x24xf32>, vector<16x24xf32> -> vector<64x24xf32>
    %11 = vector.extract_strided_slice %10 {offsets = [0, 0], sizes = [64, 8], strides = [1, 1]} : vector<64x24xf32> to vector<64x8xf32>
    %12 = vector.extract_strided_slice %10 {offsets = [0, 8], sizes = [64, 8], strides = [1, 1]} : vector<64x24xf32> to vector<64x8xf32>
    %13 = vector.extract_strided_slice %10 {offsets = [0, 16], sizes = [64, 8], strides = [1, 1]} : vector<64x24xf32> to vector<64x8xf32>
    "tpu.trace_start"() <{level = 10 : i32, message = "nd,md->nm"}> : () -> ()
    %cst_5 = arith.constant dense<0.000000e+00> : vector<64x64xf32>
    %14 = tpu.matmul %11, %12, %cst_5 {dimension_numbers = #tpu.dot_dimension_numbers<[1], [1], [0], [0], [0, 0, 1, 0], [], []>} : vector<64x8xf32>, vector<64x8xf32>, vector<64x64xf32> -> vector<64x64xf32>
    "tpu.trace_stop"() : () -> ()
    %c0_6 = arith.constant 0 : index
    %c0_7 = arith.constant 0 : index
    %15 = vector.load %arg6[%c0_6, %c0_7] : memref<64x64xf32, #tpu.memory_space<vmem>>, vector<64x64xf32>
    %16 = arith.addf %14, %15 : vector<64x64xf32>
    %cst_8 = arith.constant dense<0xFF800000> : vector<64xf32>
    %17 = vector.multi_reduction <maximumf>, %16, %cst_8 [1] : vector<64x64xf32> to vector<64xf32>
    %18 = vector.shape_cast %17 : vector<64xf32> to vector<64x1xf32>
    %19 = vector.broadcast %18 : vector<64x1xf32> to vector<64x64xf32>
    %20 = arith.subf %16, %19 : vector<64x64xf32>
    %21 = math.exp %20 : vector<64x64xf32>
    %cst_9 = arith.constant dense<0.000000e+00> : vector<64xf32>
    %22 = vector.multi_reduction <add>, %21, %cst_9 [1] : vector<64x64xf32> to vector<64xf32>
    %23 = vector.shape_cast %22 : vector<64xf32> to vector<64x1xf32>
    %24 = vector.broadcast %23 : vector<64x1xf32> to vector<64x64xf32>
    %25 = arith.divf %21, %24 : vector<64x64xf32>
    %cst_10 = arith.constant dense<0.000000e+00> : vector<64x8xf32>
    %26 = tpu.matmul %25, %13, %cst_10 {dimension_numbers = #tpu.dot_dimension_numbers<[1], [0], [0], [1], [0, 0, 1, 1], [], []>} : vector<64x64xf32>, vector<64x8xf32>, vector<64x8xf32> -> vector<64x8xf32>
    %27 = vector.extract_strided_slice %26 {offsets = [0, 0], sizes = [16, 8], strides = [1, 1]} : vector<64x8xf32> to vector<16x8xf32>
    %28 = vector.extract_strided_slice %26 {offsets = [16, 0], sizes = [16, 8], strides = [1, 1]} : vector<64x8xf32> to vector<16x8xf32>
    %29 = vector.extract_strided_slice %26 {offsets = [32, 0], sizes = [16, 8], strides = [1, 1]} : vector<64x8xf32> to vector<16x8xf32>
    %30 = vector.extract_strided_slice %26 {offsets = [48, 0], sizes = [16, 8], strides = [1, 1]} : vector<64x8xf32> to vector<16x8xf32>
    %31 = tpu.concatenate %27, %28, %29, %30 in 1 : vector<16x8xf32>, vector<16x8xf32>, vector<16x8xf32>, vector<16x8xf32> -> vector<16x32xf32>
    %c0_11 = arith.constant 0 : index
    %c0_12 = arith.constant 0 : index
    %32 = vector.load %arg4[%c0_11, %c0_12] : memref<32x32xf32, #tpu.memory_space<vmem>>, vector<32x32xf32>
    %cst_13 = arith.constant dense<0.000000e+00> : vector<16x32xf32>
    %33 = tpu.matmul %31, %32, %cst_13 {dimension_numbers = #tpu.dot_dimension_numbers<[1], [0], [0], [1], [0, 0, 1, 1], [], []>} : vector<16x32xf32>, vector<32x32xf32>, vector<16x32xf32> -> vector<16x32xf32>
    %c0_14 = arith.constant 0 : index
    %c0_15 = arith.constant 0 : index
    %34 = vector.load %arg5[%c0_14, %c0_15] : memref<1x32xf32, #tpu.memory_space<vmem>>, vector<1x32xf32>
    %35 = vector.broadcast %34 : vector<1x32xf32> to vector<16x32xf32>
    %36 = arith.addf %33, %35 : vector<16x32xf32>
    %c0_16 = arith.constant 0 : index
    %c0_17 = arith.constant 0 : index
    %37 = vector.load %arg7[%c0_16, %c0_17] : memref<16x32xf32, #tpu.memory_space<vmem>>, vector<16x32xf32>
    tpu.vector_store %arg7[%c0_16, %c0_17], %36 {strides = array<i32>} : memref<16x32xf32, #tpu.memory_space<vmem>>, vector<16x32xf32>,
    return
  }
  func.func @transform_0(%arg0: i32) -> (i32, i32) {
    %c0_i32 = arith.constant 0 : i32
    %c0_i32_0 = arith.constant 0 : i32
    %c0_i32_1 = arith.constant 0 : i32
    return %c0_i32, %c0_i32_0 : i32, i32
  }
  func.func @transform_1(%arg0: i32) -> (i32, i32) {
    %c0_i32 = arith.constant 0 : i32
    %c0_i32_0 = arith.constant 0 : i32
    %c0_i32_1 = arith.constant 0 : i32
    return %c0_i32, %c0_i32_0 : i32, i32
  }
  func.func @transform_2(%arg0: i32) -> (i32, i32) {
    %c0_i32 = arith.constant 0 : i32
    %c0_i32_0 = arith.constant 0 : i32
    %c0_i32_1 = arith.constant 0 : i32
    return %c0_i32, %c0_i32_0 : i32, i32
  }
  func.func @transform_3(%arg0: i32) -> (i32, i32) {
    %c0_i32 = arith.constant 0 : i32
    %c0_i32_0 = arith.constant 0 : i32
    %c0_i32_1 = arith.constant 0 : i32
    return %c0_i32, %c0_i32_0 : i32, i32
  }
  func.func @transform_4(%arg0: i32) -> (i32, i32) {
    %c0_i32 = arith.constant 0 : i32
    %c0_i32_0 = arith.constant 0 : i32
    %c0_i32_1 = arith.constant 0 : i32
    return %c0_i32, %c0_i32_0 : i32, i32
  }
  func.func @transform_5(%arg0: i32) -> (i32, i32) {
    %c0_i32 = arith.constant 0 : i32
    %c0_i32_0 = arith.constant 0 : i32
    %c0_i32_1 = arith.constant 0 : i32
    return %c0_i32, %c0_i32_0 : i32, i32
  }
  func.func @transform_6(%arg0: i32) -> (i32, i32) {
    %c0_i32 = arith.constant 0 : i32
    %c0_i32_0 = arith.constant 0 : i32
    %c0_i32_1 = arith.constant 0 : i32
    return %c0_i32, %c0_i32_0 : i32, i32
  }
}

</mosaic_0001>

<llo_original>
// kernel: tpu_custom_call.1
$region0: #{tpu_custom_call.1}
  #allocation0 [shape = 'u32[]', space=smem, size = 0x4, offset = 0x4, fixed_abs, tag = 'smem constant byte address 0x4 - core index']
  #allocation1 [shape = 'u32[144,128]{1,0:T(1,128)}', space=vmem, size = 0x12000, scoped, tag = 'internal scratch']
  %s0 = inlined_call_operand.hbm [shape: f32[16,32], index: 0, kind: input, shape index: {}]
  %s1 = inlined_call_operand.hbm [shape: f32[32,96], index: 1, kind: input, shape index: {}]
  %s2 = inlined_call_operand.vmem [shape: f32[1,96], index: 2, kind: input, shape index: {}]
  %s3 = inlined_call_operand.hbm [shape: f32[32,32], index: 3, kind: input, shape index: {}]
  %s4 = inlined_call_operand.vmem [shape: f32[1,32], index: 4, kind: input, shape index: {}]
  %s5 = inlined_call_operand.hbm [shape: f32[64,64], index: 5, kind: input, shape index: {}]
  %s6 = inlined_call_operand.hbm [shape: f32[16,32], index: 6, kind: output, shape index: {}]
  %s7 = sld [smem:[#allocation0]]
  $region50: #{tpu_custom_call.1} parent=0
    _
  %s9 = ssub.s32 1, %s7
  %s10 = scalar_select 0, %s9, %s7
  $region1: #{tpu_custom_call.1} parent=0
    #allocation2 [shape = 'u8[8192]{0}', space=vmem, size = 0x2000, scoped, tag = 'input window, operand 0, single buffered']
    #allocation3 [shape = 's32[1]{0}', space=sflag, size = 0x4, scoped, tag = 'scoped memory for tpu_custom_call.1']
    #allocation4 [shape = 's32[1]{0}', space=sflag, size = 0x4, scoped, tag = 'scoped memory for tpu_custom_call.1']
    #allocation5 [shape = 'u8[16384]{0}', space=vmem, size = 0x4000, scoped, tag = 'input window, operand 1, single buffered']
    #allocation6 [shape = 's32[1]{0}', space=sflag, size = 0x4, scoped, tag = 'scoped memory for tpu_custom_call.1']
    #allocation7 [shape = 'u8[16384]{0}', space=vmem, size = 0x4000, scoped, tag = 'input window, operand 3, single buffered']
    #allocation8 [shape = 'u8[32768]{0}', space=vmem, size = 0x8000, scoped, tag = 'input window, operand 5, single buffered']
    #allocation9 [shape = 's32[1]{0}', space=sflag, size = 0x4, scoped, tag = 'scoped memory for tpu_custom_call.1']
    #allocation10 [shape = 'u8[8192]{0}', space=vmem, size = 0x2000, scoped, tag = 'output window, operand 0, single buffered']
    %11 = vsyncpa [#allocation3], 0
    %12 = vsyncpa [#allocation6], 0
    %13 = vsyncpa [#allocation9], 0
    %14 = vsyncpa [#allocation4], 0
    // Predicated region
    $region2: #{tpu_custom_call.1} parent=1 // pred_check
      _
    $region3: #{tpu_custom_call.1} parent=1 // pred_check_branch
      %16 = sbr.rel (0) target = $region5
    $region4: #{tpu_custom_call.1} parent=1 // pred_region
      %s18 = ssub.s32 256, 256
      %19 = vsyncadd [#allocation3], %s18
      %s20 = sshll.u32 [#allocation2], 4
      %s21 = int_to_ptr.vmem [resolvable:$true] %s20
      %26 = dma.hbm_to_vmem [thread:$0]  %s0, 256, %s21, [#allocation3], 128, 128, 8
    $region5: #{tpu_custom_call.1} parent=1 // pred_fallthru
      _
    // Predicated region
    $region6: #{tpu_custom_call.1} parent=1 // pred_check
      _
    $region7: #{tpu_custom_call.1} parent=1 // pred_check_branch
      %28 = sbr.rel (0) target = $region9
    $region8: #{tpu_custom_call.1} parent=1 // pred_region
      %s30 = ssub.s32 512, 512
      %31 = vsyncadd [#allocation6], %s30
      %s32 = sshll.u32 [#allocation5], 4
      %s33 = int_to_ptr.vmem [resolvable:$true] %s32
      %38 = dma.hbm_to_vmem [thread:$0]  %s1, 512, %s33, [#allocation6], 128, 128, 8
    $region9: #{tpu_custom_call.1} parent=1 // pred_fallthru
      _
    // Predicated region
    $region10: #{tpu_custom_call.1} parent=1 // pred_check
      _
    $region11: #{tpu_custom_call.1} parent=1 // pred_check_branch
      %40 = sbr.rel (0) target = $region13
    $region12: #{tpu_custom_call.1} parent=1 // pred_region
      _
    $region13: #{tpu_custom_call.1} parent=1 // pred_fallthru
      _
    // Predicated region
    $region14: #{tpu_custom_call.1} parent=1 // pred_check
      _
    $region15: #{tpu_custom_call.1} parent=1 // pred_check_branch
      %42 = sbr.rel (0) target = $region17
    $region16: #{tpu_custom_call.1} parent=1 // pred_region
      %s44 = ssub.s32 512, 512
      %45 = vsyncadd [#allocation6], %s44
      %s46 = sshll.u32 [#allocation7], 4
      %s47 = int_to_ptr.vmem [resolvable:$true] %s46
      %52 = dma.hbm_to_vmem [thread:$0]  %s3, 512, %s47, [#allocation6], 128, 128, 8
    $region17: #{tpu_custom_call.1} parent=1 // pred_fallthru
      _
    // Predicated region
    $region18: #{tpu_custom_call.1} parent=1 // pred_check
      _
    $region19: #{tpu_custom_call.1} parent=1 // pred_check_branch
      %54 = sbr.rel (0) target = $region21
    $region20: #{tpu_custom_call.1} parent=1 // pred_region
      _
    $region21: #{tpu_custom_call.1} parent=1 // pred_fallthru
      _
    // Predicated region
    $region22: #{tpu_custom_call.1} parent=1 // pred_check
      _
    $region23: #{tpu_custom_call.1} parent=1 // pred_check_branch
      %56 = sbr.rel (0) target = $region25
    $region24: #{tpu_custom_call.1} parent=1 // pred_region
      %s58 = ssub.s32 1024, 1024
      %59 = vsyncadd [#allocation9], %s58
      %s60 = sshll.u32 [#allocation8], 4
      %s61 = int_to_ptr.vmem [resolvable:$true] %s60
      %66 = dma.hbm_to_vmem [thread:$0]  %s5, 1024, %s61, [#allocation9], 128, 128, 8
    $region25: #{tpu_custom_call.1} parent=1 // pred_fallthru
      _
    // Predicated region
    $region26: #{tpu_custom_call.1} parent=1 // pred_check
      _
    $region27: #{tpu_custom_call.1} parent=1 // pred_check_branch
      %68 = sbr.rel (0) target = $region29
    $region28: #{tpu_custom_call.1} parent=1 // pred_region
      %69 = dma.done [#allocation3], 256
    $region29: #{tpu_custom_call.1} parent=1 // pred_fallthru
      _
    // Predicated region
    $region30: #{tpu_custom_call.1} parent=1 // pred_check
      _
    $region31: #{tpu_custom_call.1} parent=1 // pred_check_branch
      %71 = sbr.rel (0) target = $region33
    $region32: #{tpu_custom_call.1} parent=1 // pred_region
      %72 = dma.done [#allocation6], 512
    $region33: #{tpu_custom_call.1} parent=1 // pred_fallthru
      _
    // Predicated region
    $region34: #{tpu_custom_call.1} parent=1 // pred_check
      _
    $region35: #{tpu_custom_call.1} parent=1 // pred_check_branch
      %74 = sbr.rel (0) target = $region37
    $region36: #{tpu_custom_call.1} parent=1 // pred_region
      %75 = dma.done [#allocation6], 512
    $region37: #{tpu_custom_call.1} parent=1 // pred_fallthru
      _
    // Predicated region
    $region38: #{tpu_custom_call.1} parent=1 // pred_check
      _
    $region39: #{tpu_custom_call.1} parent=1 // pred_check_branch
      %77 = sbr.rel (0) target = $region41
    $region40: #{tpu_custom_call.1} parent=1 // pred_region
      %78 = dma.done [#allocation9], 1024
    $region41: #{tpu_custom_call.1} parent=1 // pred_fallthru
      _
    %v79 = vld [vmem:[#allocation2] sm:$0xff]
    %v80 = vld [vmem:[#allocation2 + $0x8] sm:$0xff]
    %v81 = vld [vmem:[#allocation5] sm:$0xff]
    %v82 = vld [vmem:[#allocation5 + $0x8] sm:$0xff]
    %v83 = vld [vmem:[#allocation5 + $0x10] sm:$0xff]
    %v84 = vld [vmem:[#allocation5 + $0x18] sm:$0xff]
    %v85 = vld [vmem:[%s2] sm:$0x1]
    %v87 = vlaneseq
    %v88 = vshrl.u32 %v87, 7
    %v89 = vsub.s32 0, %v88
    %v90 = vrot.slane %v85, %v89
    %vm92 = vcmask 261120
    %v94 = vsel %vm92, %v79, 0
    %v97 = vsel %vm92, %v80, 0
    %99 = vmatprep.subr.mxu0 0.0
    %100 = vmatpush1.msra.mxu0 %v81
    %101 = vmatprep.subr.mxu0 0.0
    %102 = vmatpush1.msra.mxu0 %v82
    %103 = vmatprep.subr.mxu0 0.0
    %104 = vmatpush1.msra.mxu0 %v83
    %105 = vmatprep.subr.mxu0 0.0
    %106 = vmatpush1.msra.mxu0 %v84
    %107 = vmatprep.subr.mxu0 0.0
    %108 = vmatpush1.msra.mxu0 0.0
    %109 = vmatprep.subr.mxu0 0.0
    %110 = vmatpush1.msra.mxu0 0.0
    %111 = vmatprep.subr.mxu0 0.0
    %112 = vmatpush1.msra.mxu0 0.0
    %113 = vmatprep.subr.mxu0 0.0
    %114 = vmatpush1.msra.mxu0 0.0
    %115 = vmatprep.subr.mxu0 0.0
    %116 = vmatpush1.msra.mxu0 0.0
    %117 = vmatprep.subr.mxu0 0.0
    %118 = vmatpush1.msra.mxu0 0.0
    %119 = vmatprep.subr.mxu0 0.0
    %120 = vmatpush1.msra.mxu0 0.0
    %121 = vmatprep.subr.mxu0 0.0
    %122 = vmatpush1.msra.mxu0 0.0
    %123 = vmatprep.subr.mxu0 0.0
    %124 = vmatpush1.msra.mxu0 0.0
    %125 = vmatprep.subr.mxu0 0.0
    %126 = vmatpush1.msra.mxu0 0.0
    %127 = vmatprep.subr.mxu0 0.0
    %128 = vmatpush1.msra.mxu0 0.0
    %129 = vmatprep.subr.mxu0 0.0
    %130 = vmatpush1.msra.mxu0 0.0
    %131 = vmatprep.subr.mxu0 0.0
    %132 = vmatpush1.msra.mxu0 0.0
    %133 = vmatprep.subr.mxu0 0.0
    %134 = vmatpush1.msra.mxu0 0.0
    %135 = vmatprep.subr.mxu0 0.0
    %136 = vmatpush1.msra.mxu0 0.0
    %137 = vmatprep.subr.mxu0 0.0
    %138 = vmatpush1.msra.mxu0 0.0
    %139 = vmatprep.subr.mxu0 0.0
    %140 = vmatpush1.msra.mxu0 0.0
    %141 = vmatprep.subr.mxu0 0.0
    %142 = vmatpush1.msra.mxu0 0.0
    %143 = vmatprep.subr.mxu0 0.0
    %144 = vmatpush1.msra.mxu0 0.0
    %145 = vmatprep.subr.mxu0 0.0
    %146 = vmatpush1.msra.mxu0 0.0
    %147 = vmatprep.subr.mxu0 0.0
    %148 = vmatpush1.msra.mxu0 0.0
    %149 = vmatprep.subr.mxu0 0.0
    %150 = vmatpush1.msra.mxu0 0.0
    %151 = vmatprep.subr.mxu0 0.0
    %152 = vmatpush1.msra.mxu0 0.0
    %153 = vmatprep.subr.mxu0 0.0
    %154 = vmatpush1.msra.mxu0 0.0
    %155 = vmatprep.subr.mxu0 0.0
    %156 = vmatpush1.msra.mxu0 0.0
    %157 = vmatprep.subr.mxu0 0.0
    %158 = vmatpush1.msra.mxu0 0.0
    %159 = vmatprep.subr.mxu0 0.0
    %160 = vmatpush1.msra.mxu0 0.0
    %161 = vmatprep.subr.mxu0 0.0
    %162 = vmatpush1.msra.mxu0 0.0
    %163 = vmatprep.mubr.f32.mxu0 0.0
    %164 = vmatmul.mubr.f32.gmra.mrb[0].mxu0 %v94
    %v165 = vpop.f32.mrb[0].mxu0
    %v166 = vadd.f32 %v90, %v165
    %v167 = vpop.f32.mrb[0].mxu0
    %168 = vmatprep.mubr.f32.mxu0 0.0
    %169 = vmatmul.mubr.f32.gmra.mrb[0].mxu0 %v97
    %v170 = vpop.f32.mrb[0].mxu0
    %v171 = vadd.f32 %v90, %v170
    %v172 = vpop.f32.mrb[0].mxu0
    %173 = vdwg.mxu0
    %176 = vrot.lane.b32.xlu0 %v166, 104
    %v177 = vpop.permute.xlu0 %176
    %178 = vrot.lane.b32.xlu0 %v171, 104
    %v179 = vpop.permute.xlu0 %178
    %180 = vrot.lane.b32.xlu0 %v166, 80
    %v181 = vpop.permute.xlu0 %180
    %182 = vrot.lane.b32.xlu0 %v171, 80
    %v183 = vpop.permute.xlu0 %182
    %184 = vrot.lane.b32.xlu0 %v166, 56
    %v185 = vpop.permute.xlu0 %184
    %186 = vrot.lane.b32.xlu0 %v171, 56
    %v187 = vpop.permute.xlu0 %186
    %v188 = vld [vmem:[#allocation8] sm:$0xff]
    %v189 = vld [vmem:[#allocation8 + $0x8] sm:$0xff]
    %v190 = vld [vmem:[#allocation8 + $0x10] sm:$0xff]
    %v191 = vld [vmem:[#allocation8 + $0x18] sm:$0xff]
    %v192 = vld [vmem:[#allocation8 + $0x20] sm:$0xff]
    %v193 = vld [vmem:[#allocation8 + $0x28] sm:$0xff]
    %v194 = vld [vmem:[#allocation8 + $0x30] sm:$0xff]
    %v195 = vld [vmem:[#allocation8 + $0x38] sm:$0xff]
    %196 = vrot.lane.b32.xlu0 %v166, 120
    %v197 = vpop.permute.xlu0 %196
    %198 = vrot.lane.b32.xlu0 %v171, 120
    %v199 = vpop.permute.xlu0 %198
    %200 = vrot.lane.b32.xlu0 %v177, 120
    %v201 = vpop.permute.xlu0 %200
    %202 = vrot.lane.b32.xlu0 %v179, 120
    %v203 = vpop.permute.xlu0 %202
    %204 = vrot.lane.b32.xlu0 %v181, 120
    %v205 = vpop.permute.xlu0 %204
    %206 = vrot.lane.b32.xlu0 %v183, 120
    %v207 = vpop.permute.xlu0 %206
    %208 = vrot.lane.b32.xlu0 %v185, 120
    %v209 = vpop.permute.xlu0 %208
    %210 = vrot.lane.b32.xlu0 %v187, 120
    %v211 = vpop.permute.xlu0 %210
    %vm212 = vcmask 64512
    %v213 = vsel %vm212, %v166, 0
    %v215 = vsel %vm212, %v171, 0
    %v217 = vsel %vm212, %v177, 0
    %v219 = vsel %vm212, %v179, 0
    %v221 = vsel %vm212, %v181, 0
    %v223 = vsel %vm212, %v183, 0
    %v225 = vsel %vm212, %v185, 0
    %v227 = vsel %vm212, %v187, 0
    %v229 = vsel %vm212, %v197, 0
    %v231 = vsel %vm212, %v199, 0
    %v233 = vsel %vm212, %v201, 0
    %v235 = vsel %vm212, %v203, 0
    %v237 = vsel %vm212, %v205, 0
    %v239 = vsel %vm212, %v207, 0
    %v241 = vsel %vm212, %v209, 0
    %v243 = vsel %vm212, %v211, 0
    %245 = vmatprep.subr.mxu0 0.0
    %246 = vmatpush1.xpose.msra.mxu0 %v229
    %247 = vmatprep.subr.mxu0 0.0
    %248 = vmatpush1.xpose.msra.mxu0 %v231
    %249 = vmatprep.subr.mxu0 0.0
    %250 = vmatpush1.xpose.msra.mxu0 %v233
    %251 = vmatprep.subr.mxu0 0.0
    %252 = vmatpush1.xpose.msra.mxu0 %v235
    %253 = vmatprep.subr.mxu0 0.0
    %254 = vmatpush1.xpose.msra.mxu0 %v237
    %255 = vmatprep.subr.mxu0 0.0
    %256 = vmatpush1.xpose.msra.mxu0 %v239
    %257 = vmatprep.subr.mxu0 0.0
    %258 = vmatpush1.xpose.msra.mxu0 %v241
    %259 = vmatprep.subr.mxu0 0.0
    %260 = vmatpush1.xpose.msra.mxu0 %v243
    %261 = vmatprep.subr.mxu0 0.0
    %262 = vmatpush1.xpose.msra.mxu0 0.0
    %263 = vmatprep.subr.mxu0 0.0
    %264 = vmatpush1.xpose.msra.mxu0 0.0
    %265 = vmatprep.subr.mxu0 0.0
    %266 = vmatpush1.xpose.msra.mxu0 0.0
    %267 = vmatprep.subr.mxu0 0.0
    %268 = vmatpush1.xpose.msra.mxu0 0.0
    %269 = vmatprep.subr.mxu0 0.0
    %270 = vmatpush1.xpose.msra.mxu0 0.0
    %271 = vmatprep.subr.mxu0 0.0
    %272 = vmatpush1.xpose.msra.mxu0 0.0
    %273 = vmatprep.subr.mxu0 0.0
    %274 = vmatpush1.xpose.msra.mxu0 0.0
    %275 = vmatprep.subr.mxu0 0.0
    %276 = vmatpush1.xpose.msra.mxu0 0.0
    %277 = vmatprep.subr.mxu0 0.0
    %278 = vmatpush1.xpose.msra.mxu0 0.0
    %279 = vmatprep.subr.mxu0 0.0
    %280 = vmatpush1.xpose.msra.mxu0 0.0
    %281 = vmatprep.subr.mxu0 0.0
    %282 = vmatpush1.xpose.msra.mxu0 0.0
    %283 = vmatprep.subr.mxu0 0.0
    %284 = vmatpush1.xpose.msra.mxu0 0.0
    %285 = vmatprep.subr.mxu0 0.0
    %286 = vmatpush1.xpose.msra.mxu0 0.0
    %287 = vmatprep.subr.mxu0 0.0
    %288 = vmatpush1.xpose.msra.mxu0 0.0
    %289 = vmatprep.subr.mxu0 0.0
    %290 = vmatpush1.xpose.msra.mxu0 0.0
    %291 = vmatprep.subr.mxu0 0.0
    %292 = vmatpush1.xpose.msra.mxu0 0.0
    %293 = vmatprep.subr.mxu0 0.0
    %294 = vmatpush1.xpose.msra.mxu0 0.0
    %295 = vmatprep.subr.mxu0 0.0
    %296 = vmatpush1.xpose.msra.mxu0 0.0
    %297 = vmatprep.subr.mxu0 0.0
    %298 = vmatpush1.xpose.msra.mxu0 0.0
    %299 = vmatprep.subr.mxu0 0.0
    %300 = vmatpush1.xpose.msra.mxu0 0.0
    %301 = vmatprep.subr.mxu0 0.0
    %302 = vmatpush1.xpose.msra.mxu0 0.0
    %303 = vmatprep.subr.mxu0 0.0
    %304 = vmatpush1.xpose.msra.mxu0 0.0
    %305 = vmatprep.subr.mxu0 0.0
    %306 = vmatpush1.xpose.msra.mxu0 0.0
    %307 = vmatprep.subr.mxu0 0.0
    %308 = vmatpush1.xpose.msra.mxu0 0.0
    %309 = vmatprep.mubr.f32.mxu0 0.0
    %310 = vmatmul.mubr.f32.gmra.mrb[0].mxu0 %v213
    %v311 = vpop.f32.mrb[0].mxu0
    %v312 = vadd.f32 %v188, %v311
    %v313 = vpop.f32.mrb[0].mxu0
    %314 = vmatprep.mubr.f32.mxu0 0.0
    %315 = vmatmul.mubr.f32.gmra.mrb[0].mxu0 %v215
    %v316 = vpop.f32.mrb[0].mxu0
    %v317 = vadd.f32 %v189, %v316
    %v318 = vpop.f32.mrb[0].mxu0
    %319 = vmatprep.mubr.f32.mxu0 0.0
    %320 = vmatmul.mubr.f32.gmra.mrb[0].mxu0 %v217
    %v321 = vpop.f32.mrb[0].mxu0
    %v322 = vadd.f32 %v190, %v321
    %v323 = vpop.f32.mrb[0].mxu0
    %324 = vmatprep.mubr.f32.mxu0 0.0
    %325 = vmatmul.mubr.f32.gmra.mrb[0].mxu0 %v219
    %v326 = vpop.f32.mrb[0].mxu0
    %v327 = vadd.f32 %v191, %v326
    %v328 = vpop.f32.mrb[0].mxu0
    %329 = vmatprep.mubr.f32.mxu0 0.0
    %330 = vmatmul.mubr.f32.gmra.mrb[0].mxu0 %v221
    %v331 = vpop.f32.mrb[0].mxu0
    %v332 = vadd.f32 %v192, %v331
    %v333 = vpop.f32.mrb[0].mxu0
    %334 = vmatprep.mubr.f32.mxu0 0.0
    %335 = vmatmul.mubr.f32.gmra.mrb[0].mxu0 %v223
    %v336 = vpop.f32.mrb[0].mxu0
    %v337 = vadd.f32 %v193, %v336
    %v338 = vpop.f32.mrb[0].mxu0
    %339 = vmatprep.mubr.f32.mxu0 0.0
    %340 = vmatmul.mubr.f32.gmra.mrb[0].mxu0 %v225
    %v341 = vpop.f32.mrb[0].mxu0
    %v342 = vadd.f32 %v194, %v341
    %v343 = vpop.f32.mrb[0].mxu0
    %344 = vmatprep.mubr.f32.mxu0 0.0
    %345 = vmatmul.mubr.f32.gmra.mrb[0].mxu0 %v227
    %v346 = vpop.f32.mrb[0].mxu0
    %v347 = vadd.f32 %v195, %v346
    %v348 = vpop.f32.mrb[0].mxu0
    %349 = vdwg.mxu0
    %vm350 = vcmask 523264
    %v351 = vsel %vm350, %v312, -inf
    %352 = vmax.xlane.f32.xlu0 %v351
    %v353 = vpop.xlane.xlu0 %352
    %v354 = vsel %vm350, %v317, -inf
    %355 = vmax.xlane.f32.xlu0 %v354
    %v356 = vpop.xlane.xlu0 %355
    %v357 = vsel %vm350, %v322, -inf
    %358 = vmax.xlane.f32.xlu0 %v357
    %v359 = vpop.xlane.xlu0 %358
    %v360 = vsel %vm350, %v327, -inf
    %361 = vmax.xlane.f32.xlu0 %v360
    %v362 = vpop.xlane.xlu0 %361
    %v363 = vsel %vm350, %v332, -inf
    %364 = vmax.xlane.f32.xlu0 %v363
    %v365 = vpop.xlane.xlu0 %364
    %v366 = vsel %vm350, %v337, -inf
    %367 = vmax.xlane.f32.xlu0 %v366
    %v368 = vpop.xlane.xlu0 %367
    %v369 = vsel %vm350, %v342, -inf
    %370 = vmax.xlane.f32.xlu0 %v369
    %v371 = vpop.xlane.xlu0 %370
    %v372 = vsel %vm350, %v347, -inf
    %373 = vmax.xlane.f32.xlu0 %v372
    %v374 = vpop.xlane.xlu0 %373
    %v375 = vsub.f32 %v312, %v353
    %v376 = vsub.f32 %v317, %v356
    %v377 = vsub.f32 %v322, %v359
    %v378 = vsub.f32 %v327, %v362
    %v379 = vsub.f32 %v332, %v365
    %v380 = vsub.f32 %v337, %v368
    %v381 = vsub.f32 %v342, %v371
    %v382 = vsub.f32 %v347, %v374
    %v383 = vmul.f32 %v375, 1.442695
    %v384 = vpow.pop %v383
    %v385 = vmul.f32 %v376, 1.442695
    %v386 = vpow.pop %v385
    %v387 = vmul.f32 %v377, 1.442695
    %v388 = vpow.pop %v387
    %v389 = vmul.f32 %v378, 1.442695
    %v390 = vpow.pop %v389
    %v391 = vmul.f32 %v379, 1.442695
    %v392 = vpow.pop %v391
    %v393 = vmul.f32 %v380, 1.442695
    %v394 = vpow.pop %v393
    %v395 = vmul.f32 %v381, 1.442695
    %v396 = vpow.pop %v395
    %v397 = vmul.f32 %v382, 1.442695
    %v398 = vpow.pop %v397
    %v399 = vsel %vm350, %v384, 0.0
    %400 = vadd.xlane.f32.xlu0 %v399
    %v401 = vpop.xlane.xlu0 %400
    %v402 = vsel %vm350, %v386, 0.0
    %403 = vadd.xlane.f32.xlu0 %v402
    %v404 = vpop.xlane.xlu0 %403
    %v405 = vsel %vm350, %v388, 0.0
    %406 = vadd.xlane.f32.xlu0 %v405
    %v407 = vpop.xlane.xlu0 %406
    %v408 = vsel %vm350, %v390, 0.0
    %409 = vadd.xlane.f32.xlu0 %v408
    %v410 = vpop.xlane.xlu0 %409
    %v411 = vsel %vm350, %v392, 0.0
    %412 = vadd.xlane.f32.xlu0 %v411
    %v413 = vpop.xlane.xlu0 %412
    %v414 = vsel %vm350, %v394, 0.0
    %415 = vadd.xlane.f32.xlu0 %v414
    %v416 = vpop.xlane.xlu0 %415
    %v417 = vsel %vm350, %v396, 0.0
    %418 = vadd.xlane.f32.xlu0 %v417
    %v419 = vpop.xlane.xlu0 %418
    %v420 = vsel %vm350, %v398, 0.0
    %421 = vadd.xlane.f32.xlu0 %v420
    %v422 = vpop.xlane.xlu0 %421
    %v423 = vrcp.pop %v401
    %v424 = vmul.f32 %v384, %v423
    %v425 = vrcp.pop %v404
    %v426 = vmul.f32 %v386, %v425
    %v427 = vrcp.pop %v407
    %v428 = vmul.f32 %v388, %v427
    %v429 = vrcp.pop %v410
    %v430 = vmul.f32 %v390, %v429
    %v431 = vrcp.pop %v413
    %v432 = vmul.f32 %v392, %v431
    %v433 = vrcp.pop %v416
    %v434 = vmul.f32 %v394, %v433
    %v435 = vrcp.pop %v419
    %v436 = vmul.f32 %v396, %v435
    %v437 = vrcp.pop %v422
    %v438 = vmul.f32 %v398, %v437
    %439 = vrot.lane.b32.xlu0 %v166, 112
    %v440 = vpop.permute.xlu0 %439
    %441 = vrot.lane.b32.xlu0 %v171, 112
    %v442 = vpop.permute.xlu0 %441
    %443 = vrot.lane.b32.xlu0 %v177, 112
    %v444 = vpop.permute.xlu0 %443
    %445 = vrot.lane.b32.xlu0 %v179, 112
    %v446 = vpop.permute.xlu0 %445
    %447 = vrot.lane.b32.xlu0 %v181, 112
    %v448 = vpop.permute.xlu0 %447
    %449 = vrot.lane.b32.xlu0 %v183, 112
    %v450 = vpop.permute.xlu0 %449
    %451 = vrot.lane.b32.xlu0 %v185, 112
    %v452 = vpop.permute.xlu0 %451
    %453 = vrot.lane.b32.xlu0 %v187, 112
    %v454 = vpop.permute.xlu0 %453
    %v464 = vsel %vm350, %v424, 0
    %v467 = vsel %vm350, %v426, 0
    %v470 = vsel %vm350, %v428, 0
    %v473 = vsel %vm350, %v430, 0
    %v476 = vsel %vm350, %v432, 0
    %v479 = vsel %vm350, %v434, 0
    %v482 = vsel %vm350, %v436, 0
    %v485 = vsel %vm350, %v438, 0
    %487 = vmatprep.subr.mxu0 0.0
    %488 = vmatpush1.msra.mxu0 %v440
    %489 = vmatprep.subr.mxu0 0.0
    %490 = vmatpush1.msra.mxu0 %v442
    %491 = vmatprep.subr.mxu0 0.0
    %492 = vmatpush1.msra.mxu0 %v444
    %493 = vmatprep.subr.mxu0 0.0
    %494 = vmatpush1.msra.mxu0 %v446
    %495 = vmatprep.subr.mxu0 0.0
    %496 = vmatpush1.msra.mxu0 %v448
    %497 = vmatprep.subr.mxu0 0.0
    %498 = vmatpush1.msra.mxu0 %v450
    %499 = vmatprep.subr.mxu0 0.0
    %500 = vmatpush1.msra.mxu0 %v452
    %501 = vmatprep.subr.mxu0 0.0
    %502 = vmatpush1.msra.mxu0 %v454
    %503 = vmatprep.subr.mxu0 0.0
    %504 = vmatpush1.msra.mxu0 0.0
    %505 = vmatprep.subr.mxu0 0.0
    %506 = vmatpush1.msra.mxu0 0.0
    %507 = vmatprep.subr.mxu0 0.0
    %508 = vmatpush1.msra.mxu0 0.0
    %509 = vmatprep.subr.mxu0 0.0
    %510 = vmatpush1.msra.mxu0 0.0
    %511 = vmatprep.subr.mxu0 0.0
    %512 = vmatpush1.msra.mxu0 0.0
    %513 = vmatprep.subr.mxu0 0.0
    %514 = vmatpush1.msra.mxu0 0.0
    %515 = vmatprep.subr.mxu0 0.0
    %516 = vmatpush1.msra.mxu0 0.0
    %517 = vmatprep.subr.mxu0 0.0
    %518 = vmatpush1.msra.mxu0 0.0
    %519 = vmatprep.subr.mxu0 0.0
    %520 = vmatpush1.msra.mxu0 0.0
    %521 = vmatprep.subr.mxu0 0.0
    %522 = vmatpush1.msra.mxu0 0.0
    %523 = vmatprep.subr.mxu0 0.0
    %524 = vmatpush1.msra.mxu0 0.0
    %525 = vmatprep.subr.mxu0 0.0
    %526 = vmatpush1.msra.mxu0 0.0
    %527 = vmatprep.subr.mxu0 0.0
    %528 = vmatpush1.msra.mxu0 0.0
    %529 = vmatprep.subr.mxu0 0.0
    %530 = vmatpush1.msra.mxu0 0.0
    %531 = vmatprep.subr.mxu0 0.0
    %532 = vmatpush1.msra.mxu0 0.0
    %533 = vmatprep.subr.mxu0 0.0
    %534 = vmatpush1.msra.mxu0 0.0
    %535 = vmatprep.subr.mxu0 0.0
    %536 = vmatpush1.msra.mxu0 0.0
    %537 = vmatprep.subr.mxu0 0.0
    %538 = vmatpush1.msra.mxu0 0.0
    %539 = vmatprep.subr.mxu0 0.0
    %540 = vmatpush1.msra.mxu0 0.0
    %541 = vmatprep.subr.mxu0 0.0
    %542 = vmatpush1.msra.mxu0 0.0
    %543 = vmatprep.subr.mxu0 0.0
    %544 = vmatpush1.msra.mxu0 0.0
    %545 = vmatprep.subr.mxu0 0.0
    %546 = vmatpush1.msra.mxu0 0.0
    %547 = vmatprep.subr.mxu0 0.0
    %548 = vmatpush1.msra.mxu0 0.0
    %549 = vmatprep.subr.mxu0 0.0
    %550 = vmatpush1.msra.mxu0 0.0
    %551 = vmatprep.mubr.f32.mxu0 0.0
    %552 = vmatmul.mubr.f32.gmra.mrb[0].mxu0 %v464
    %v553 = vpop.f32.mrb[0].mxu0
    %v554 = vadd.f32 0.0, %v553
    %v555 = vpop.f32.mrb[0].mxu0
    %556 = vmatprep.mubr.f32.mxu0 0.0
    %557 = vmatmul.mubr.f32.gmra.mrb[0].mxu0 %v467
    %v558 = vpop.f32.mrb[0].mxu0
    %v559 = vadd.f32 0.0, %v558
    %v560 = vpop.f32.mrb[0].mxu0
    %561 = vmatprep.mubr.f32.mxu0 0.0
    %562 = vmatmul.mubr.f32.gmra.mrb[0].mxu0 %v470
    %v563 = vpop.f32.mrb[0].mxu0
    %v564 = vadd.f32 0.0, %v563
    %v565 = vpop.f32.mrb[0].mxu0
    %566 = vmatprep.mubr.f32.mxu0 0.0
    %567 = vmatmul.mubr.f32.gmra.mrb[0].mxu0 %v473
    %v568 = vpop.f32.mrb[0].mxu0
    %v569 = vadd.f32 0.0, %v568
    %v570 = vpop.f32.mrb[0].mxu0
    %571 = vmatprep.mubr.f32.mxu0 0.0
    %572 = vmatmul.mubr.f32.gmra.mrb[0].mxu0 %v476
    %v573 = vpop.f32.mrb[0].mxu0
    %v574 = vadd.f32 0.0, %v573
    %v575 = vpop.f32.mrb[0].mxu0
    %576 = vmatprep.mubr.f32.mxu0 0.0
    %577 = vmatmul.mubr.f32.gmra.mrb[0].mxu0 %v479
    %v578 = vpop.f32.mrb[0].mxu0
    %v579 = vadd.f32 0.0, %v578
    %v580 = vpop.f32.mrb[0].mxu0
    %581 = vmatprep.mubr.f32.mxu0 0.0
    %582 = vmatmul.mubr.f32.gmra.mrb[0].mxu0 %v482
    %v583 = vpop.f32.mrb[0].mxu0
    %v584 = vadd.f32 0.0, %v583
    %v585 = vpop.f32.mrb[0].mxu0
    %586 = vmatprep.mubr.f32.mxu0 0.0
    %587 = vmatmul.mubr.f32.gmra.mrb[0].mxu0 %v485
    %v588 = vpop.f32.mrb[0].mxu0
    %v589 = vadd.f32 0.0, %v588
    %v590 = vpop.f32.mrb[0].mxu0
    %591 = vdwg.mxu0
    %594 = vrot.lane.b32.xlu0 %v564, 8
    %v595 = vpop.permute.xlu0 %594
    %596 = vrot.lane.b32.xlu0 %v569, 8
    %v597 = vpop.permute.xlu0 %596
    %602 = vrot.lane.b32.xlu0 %v574, 16
    %v603 = vpop.permute.xlu0 %602
    %604 = vrot.lane.b32.xlu0 %v579, 16
    %v605 = vpop.permute.xlu0 %604
    %610 = vrot.lane.b32.xlu0 %v584, 24
    %v611 = vpop.permute.xlu0 %610
    %612 = vrot.lane.b32.xlu0 %v589, 24
    %v613 = vpop.permute.xlu0 %612
    %v616 = vsel %vm212, %v554, %v595
    %v617 = vsel %vm212, %v559, %v597
    %vm618 = vcmask 130048
    %v619 = vsel %vm618, %v616, %v603
    %v620 = vsel %vm618, %v617, %v605
    %vm621 = vcmask 195584
    %v622 = vsel %vm621, %v619, %v611
    %v623 = vsel %vm621, %v620, %v613
    %v624 = vld [vmem:[#allocation7] sm:$0xff]
    %v625 = vld [vmem:[#allocation7 + $0x8] sm:$0xff]
    %v626 = vld [vmem:[#allocation7 + $0x10] sm:$0xff]
    %v627 = vld [vmem:[#allocation7 + $0x18] sm:$0xff]
    %v628 = vld [vmem:[%s4] sm:$0x1]
    %v630 = vlaneseq
    %v631 = vshrl.u32 %v630, 7
    %v632 = vsub.s32 0, %v631
    %v633 = vrot.slane %v628, %v632
    %v636 = vsel %vm92, %v622, 0
    %v639 = vsel %vm92, %v623, 0
    %641 = vmatprep.subr.mxu0 0.0
    %642 = vmatpush1.msra.mxu0 %v624
    %643 = vmatprep.subr.mxu0 0.0
    %644 = vmatpush1.msra.mxu0 %v625
    %645 = vmatprep.subr.mxu0 0.0
    %646 = vmatpush1.msra.mxu0 %v626
    %647 = vmatprep.subr.mxu0 0.0
    %648 = vmatpush1.msra.mxu0 %v627
    %649 = vmatprep.subr.mxu0 0.0
    %650 = vmatpush1.msra.mxu0 0.0
    %651 = vmatprep.subr.mxu0 0.0
    %652 = vmatpush1.msra.mxu0 0.0
    %653 = vmatprep.subr.mxu0 0.0
    %654 = vmatpush1.msra.mxu0 0.0
    %655 = vmatprep.subr.mxu0 0.0
    %656 = vmatpush1.msra.mxu0 0.0
    %657 = vmatprep.subr.mxu0 0.0
    %658 = vmatpush1.msra.mxu0 0.0
    %659 = vmatprep.subr.mxu0 0.0
    %660 = vmatpush1.msra.mxu0 0.0
    %661 = vmatprep.subr.mxu0 0.0
    %662 = vmatpush1.msra.mxu0 0.0
    %663 = vmatprep.subr.mxu0 0.0
    %664 = vmatpush1.msra.mxu0 0.0
    %665 = vmatprep.subr.mxu0 0.0
    %666 = vmatpush1.msra.mxu0 0.0
    %667 = vmatprep.subr.mxu0 0.0
    %668 = vmatpush1.msra.mxu0 0.0
    %669 = vmatprep.subr.mxu0 0.0
    %670 = vmatpush1.msra.mxu0 0.0
    %671 = vmatprep.subr.mxu0 0.0
    %672 = vmatpush1.msra.mxu0 0.0
    %673 = vmatprep.subr.mxu0 0.0
    %674 = vmatpush1.msra.mxu0 0.0
    %675 = vmatprep.subr.mxu0 0.0
    %676 = vmatpush1.msra.mxu0 0.0
    %677 = vmatprep.subr.mxu0 0.0
    %678 = vmatpush1.msra.mxu0 0.0
    %679 = vmatprep.subr.mxu0 0.0
    %680 = vmatpush1.msra.mxu0 0.0
    %681 = vmatprep.subr.mxu0 0.0
    %682 = vmatpush1.msra.mxu0 0.0
    %683 = vmatprep.subr.mxu0 0.0
    %684 = vmatpush1.msra.mxu0 0.0
    %685 = vmatprep.subr.mxu0 0.0
    %686 = vmatpush1.msra.mxu0 0.0
    %687 = vmatprep.subr.mxu0 0.0
    %688 = vmatpush1.msra.mxu0 0.0
    %689 = vmatprep.subr.mxu0 0.0
    %690 = vmatpush1.msra.mxu0 0.0
    %691 = vmatprep.subr.mxu0 0.0
    %692 = vmatpush1.msra.mxu0 0.0
    %693 = vmatprep.subr.mxu0 0.0
    %694 = vmatpush1.msra.mxu0 0.0
    %695 = vmatprep.subr.mxu0 0.0
    %696 = vmatpush1.msra.mxu0 0.0
    %697 = vmatprep.subr.mxu0 0.0
    %698 = vmatpush1.msra.mxu0 0.0
    %699 = vmatprep.subr.mxu0 0.0
    %700 = vmatpush1.msra.mxu0 0.0
    %701 = vmatprep.subr.mxu0 0.0
    %702 = vmatpush1.msra.mxu0 0.0
    %703 = vmatprep.subr.mxu0 0.0
    %704 = vmatpush1.msra.mxu0 0.0
    %705 = vmatprep.mubr.f32.mxu0 0.0
    %706 = vmatmul.mubr.f32.gmra.mrb[0].mxu0 %v636
    %v707 = vpop.f32.mrb[0].mxu0
    %v708 = vadd.f32 %v633, %v707
    %v709 = vpop.f32.mrb[0].mxu0
    %710 = vmatprep.mubr.f32.mxu0 0.0
    %711 = vmatmul.mubr.f32.gmra.mrb[0].mxu0 %v639
    %v712 = vpop.f32.mrb[0].mxu0
    %v713 = vadd.f32 %v633, %v712
    %v714 = vpop.f32.mrb[0].mxu0
    %715 = vdwg.mxu0
    %716 = vst.msk [vmem:[#allocation10] sm:$0xff] %vm92, %v708
    %717 = vst.msk [vmem:[#allocation10 + $0x8] sm:$0xff] %vm92, %v713
    // Predicated region
    $region42: #{tpu_custom_call.1} parent=1 // pred_check
      _
    $region43: #{tpu_custom_call.1} parent=1 // pred_check_branch
      %719 = sbr.rel (0) target = $region45
    $region44: #{tpu_custom_call.1} parent=1 // pred_region
      %s721 = ssub.s32 256, 256
      %722 = vsyncadd [#allocation4], %s721
      %s723 = sshll.u32 [#allocation10], 4
      %s724 = int_to_ptr.vmem [resolvable:$true] %s723
      %729 = dma.vmem_to_hbm [thread:$0]  %s724, 256, %s6, [#allocation4], 128, 128, 8
    $region45: #{tpu_custom_call.1} parent=1 // pred_fallthru
      _
    // Predicated region
    $region46: #{tpu_custom_call.1} parent=1 // pred_check
      _
    $region47: #{tpu_custom_call.1} parent=1 // pred_check_branch
      %731 = sbr.rel (0) target = $region49
    $region48: #{tpu_custom_call.1} parent=1 // pred_region
      %732 = dma.done [#allocation4], 256
    $region49: #{tpu_custom_call.1} parent=1 // pred_fallthru
      _
    %733 = vsyncpa [#allocation3], 1
    %734 = vsyncpa [#allocation6], 1
    %735 = vsyncpa [#allocation9], 1
    %736 = vsyncpa [#allocation4], 1

</llo_original>
